<compile_context>
chip_gen: v5e
topology: v5e:2x2
jax: 0.10.0
libtpu: 0.0.40
codegen_flags: <defaults>
</compile_context>

<pallas_src>
import jax
import jax.numpy as jnp
from jax.experimental import pallas as pl
from jax.experimental.pallas import tpu as pltpu


# ----------------------------------------------------------------------------
# Primary path: single HBM -> HBM DMA (no VMEM round trip).
# ----------------------------------------------------------------------------
def _identity_dma_kernel(w_hbm_ref, o_hbm_ref, copy_sem):
    cp = pltpu.make_async_copy(w_hbm_ref, o_hbm_ref, copy_sem)
    cp.start()
    cp.wait()


def identity_layer_2d(weight: jax.Array) -> jax.Array:
    """Pallas equivalent of IdentityLayer2D.forward(): returns `weight`.

    Materializes the result with one HBM->HBM DMA at full HBM bandwidth.
    """
    m, n = weight.shape
    nbytes = m * n * weight.dtype.itemsize
    return pl.pallas_call(
        _identity_dma_kernel,
        out_shape=jax.ShapeDtypeStruct((m, n), weight.dtype),
        in_specs=[pl.BlockSpec(memory_space=pl.ANY)],
        out_specs=pl.BlockSpec(memory_space=pl.ANY),
        scratch_shapes=[pltpu.SemaphoreType.DMA],
        compiler_params=pltpu.CompilerParams(has_side_effects=True),
        # Pure memory traffic: read m*n + write m*n bytes, zero flops.
        cost_estimate=pl.CostEstimate(
            flops=0, transcendentals=0, bytes_accessed=2 * nbytes
        ),
    )(weight)


# ----------------------------------------------------------------------------
# Alternative path: tiled VMEM copy with large, lane-dense blocks.
# ----------------------------------------------------------------------------
def _identity_copy_kernel(w_ref, o_ref):
    # Pure copy of the current (tm, n) tile (full-width rows -> unmasked vst).
    o_ref[...] = w_ref[...]


def _sublane_pack(dtype) -> int:
    # Sublane packing granularity: 8 rows for 32-bit, 16 for 16-bit, 32 for 8-bit.
    itemsize = jnp.dtype(dtype).itemsize
    return 8 * max(1, 4 // itemsize)


def _choose_row_tile(m, n, dtype, target_bytes, max_bytes):
    itemsize = jnp.dtype(dtype).itemsize
    pack = _sublane_pack(dtype)
    row_bytes = max(1, n * itemsize)
    # Aim for multi-MiB blocks (>= ~85% of HBM roofline), rounded to packing.
    tm = max(pack, (target_bytes // row_bytes) // pack * pack)
    # Never exceed the (packing-padded) number of rows.
    tm = min(tm, pl.cdiv(m, pack) * pack)
    # Cap per-block footprint: with double-buffered input + output (~4x block)
    # this stays well inside v7x's 64 MiB VMEM / 32 MiB default scoped limit.
    while tm > pack and tm * row_bytes > max_bytes:
        tm -= pack
    return tm


def identity_layer_2d_tiled(
    weight: jax.Array,
    *,
    tm=None,
    target_block_bytes: int = 2 << 20,  # ~2 MiB blocks
    max_block_bytes: int = 6 << 20,     # 4 buffers -> <= 24 MiB VMEM (v7x-safe)
) -> jax.Array:
    """Tiled VMEM-copy variant (kept for fusion with other grid work)."""
    m, n = weight.shape
    if tm is None:
        tm = _choose_row_tile(m, n, weight.dtype, target_block_bytes, max_block_bytes)
    grid = (pl.cdiv(m, tm),)  # ragged last block is masked by Pallas
    nbytes = m * n * weight.dtype.itemsize
    return pl.pallas_call(
        _identity_copy_kernel,
        out_shape=jax.ShapeDtypeStruct((m, n), weight.dtype),
        grid_spec=pltpu.PrefetchScalarGridSpec(
            num_scalar_prefetch=0,
            grid=grid,
            in_specs=[pl.BlockSpec((tm, n), lambda i: (i, 0))],
            out_specs=pl.BlockSpec((tm, n), lambda i: (i, 0)),
        ),
        compiler_params=pltpu.CompilerParams(
            # Row axis is independent -> shardable across v7x's 2 TensorCores.
            dimension_semantics=("parallel",),
        ),
        cost_estimate=pl.CostEstimate(
            flops=0, transcendentals=0, bytes_accessed=2 * nbytes
        ),
    )(weight)


def xavier_normal_init(key, m: int, n: int, dtype=jnp.float32) -> jax.Array:
    # torch.nn.init.xavier_normal_: std = gain * sqrt(2 / (fan_in + fan_out)),
    # gain = 1.0, fan_in = n, fan_out = m for a (m, n) 2-D tensor.
    std = (2.0 / (m + n)) ** 0.5
    return (jax.random.normal(key, (m, n), dtype=jnp.float32) * std).astype(dtype)


if __name__ == "__main__":
    key = jax.random.PRNGKey(0)
    k1, k2, k3 = jax.random.split(key, 3)

    # Small, TPU-friendly shape consistent with the module (m, n).
    m, n = 32, 128
    weight = xavier_normal_init(k1, m, n)

    # Primary (single-DMA) path.
    out = jax.block_until_ready(identity_layer_2d(weight))
    assert out.shape == (m, n)
    assert out.dtype == weight.dtype
    assert bool(jnp.all(out == weight))

    # Tiled path at the same shape.
    out_tiled = jax.block_until_ready(identity_layer_2d_tiled(weight))
    assert bool(jnp.all(out_tiled == weight))

    # Ragged row count: exercises the cdiv grid / masked last block.
    w2 = xavier_normal_init(k2, 200, 384)
    out2 = jax.block_until_ready(identity_layer_2d_tiled(w2, tm=64))
    assert bool(jnp.all(out2 == w2))
    out2_dma = jax.block_until_ready(identity_layer_2d(w2))
    assert bool(jnp.all(out2_dma == w2))

    # bf16 weight: exercises dtype-aware sublane packing in the tiled path.
    w3 = xavier_normal_init(k3, 64, 256, dtype=jnp.bfloat16)
    out3 = jax.block_until_ready(identity_layer_2d_tiled(w3))
    assert bool(jnp.all(out3 == w3))
    out3_dma = jax.block_until_ready(identity_layer_2d(w3))
    assert bool(jnp.all(out3_dma == w3))

    print("KERNEL_OK")
</pallas_src>

<mosaic_0001>
module attributes {stable_mosaic.version = 11 : i64} {
  func.func @_identity_dma_kernel(%arg0: memref<32x128xf32, #tpu.memory_space<any>>, %arg1: memref<32x128xf32, #tpu.memory_space<any>>, %arg2: memref<!tpu.dma_semaphore, #tpu.memory_space<semaphore_mem>>) attributes {dimension_semantics = [], scalar_prefetch = 0 : i64, scratch_operands = 1 : i64, tpu.core_type = #tpu.core_type<tc>} {
    tpu.enqueue_dma source(%arg0 : memref<32x128xf32, #tpu.memory_space<any>>) target(%arg1 : memref<32x128xf32, #tpu.memory_space<any>>) target_semaphore(%arg2 : memref<!tpu.dma_semaphore, #tpu.memory_space<semaphore_mem>>)
    tpu.wait_dma2 semaphore(%arg2 : memref<!tpu.dma_semaphore, #tpu.memory_space<semaphore_mem>>) src(%arg0 : memref<32x128xf32, #tpu.memory_space<any>>) dst(%arg1 : memref<32x128xf32, #tpu.memory_space<any>>)
    return
  }
}

</mosaic_0001>

<llo_original>
// kernel: tpu_custom_call.1
$region0: #{tpu_custom_call.1}
  #allocation0 [shape = 'u32[]', space=smem, size = 0x4, offset = 0x4, fixed_abs, tag = 'smem constant byte address 0x4 - core index']
  #allocation1 [shape = 'u32[72,128]{1,0:T(1,128)}', space=vmem, size = 0x9000, scoped, tag = 'internal scratch']
  #allocation2 [shape = 's32[1]{0}', space=sflag, size = 0x4, scoped, tag = 'scratch operand']
  #allocation3 [shape = 's32[]', space=sflag, size = 0x4, offset = 0, fixed_abs, tag = 'sflag constant byte address 0x0 - dummy sync flag']
  #allocation4 [shape = 'u32[0]{0}', space=smem, size = 0, offset = 0, fixed_abs, tag = 'smem constant byte address 0x0 - null']
  %s0 = inlined_call_operand.hbm [shape: f32[32,128], index: 0, kind: input, shape index: {}]
  %s1 = inlined_call_operand.hbm [shape: f32[32,128], index: 1, kind: output, shape index: {}]
  %s2 = sld [smem:[#allocation0]]
  $region2: #{tpu_custom_call.1} parent=0
    _
  %s4 = ssub.s32 1, %s2
  %s5 = scalar_select 0, %s4, %s2
  %s7 = sshll.u32 1, 14
  %s8 = sxor.u32 4294967295, %s7
  %s10 = sshll.u32 %s0, 4
  %s11 = int_to_ptr.hbm [resolvable:$true] %s10
  %s12 = sshll.u32 %s1, 4
  %s13 = int_to_ptr.hbm [resolvable:$true] %s12
  %16 = dma.general %s11, 512, %s13, [#allocation2], [#allocation3], [#allocation4], 0, 0
  %s17 = smul.u32 32, 1
  %s18 = sshll.u32 %s17, 4
  %19 = dma.done [#allocation2], %s18
  %20 = vsyncmov [#allocation2]
  %s21 = vpop.sfrf %20
  %p22 = scmp.eq.s32.totalorder %s21, 0
  %p23 = pneg %p22
  %25 = shalt.err (%p23)

</llo_original>
